<compile_context>
chip_gen: v7x
topology: tpu7x:2x2x1
jax: 0.10.0
libtpu: 0.0.40
codegen_flags: <defaults>
</compile_context>

<pallas_src>
import jax
import jax.numpy as jnp
from jax import lax
from jax.experimental import pallas as pl
from jax.experimental.pallas import tpu as pltpu


def _chunk_fold(est_ref, gt_ref, n_chunks, tb):
    """f32 (tb, 128) sum over `n_chunks` 128-lane chunks of (est - gt).

    Subtracts per 128-lane chunk (never materializes the whole tile) and folds
    into 4 independent accumulators so the accumulate chain is not serial.
    """
    zero = jnp.zeros((tb, 128), jnp.float32)
    if n_chunks <= 0:
        return zero
    n_acc = 4
    groups = n_chunks // n_acc

    def chunk(start):
        sl = pl.ds(start, 128)
        return (est_ref[:, sl] - gt_ref[:, sl]).astype(jnp.float32)

    accs = (zero, zero, zero, zero)
    if groups > 0:
        def body(g, accs):
            base = pl.multiple_of(g * (n_acc * 128), 128)
            return tuple(a + chunk(base + t * 128) for t, a in enumerate(accs))
        accs = lax.fori_loop(0, groups, body, accs, unroll=min(4, groups))
    total = (accs[0] + accs[1]) + (accs[2] + accs[3])
    # Statically-known leftover chunks (< 4): unrolled with static offsets.
    for t in range(groups * n_acc, n_chunks):
        total = total + chunk(t * 128)
    return total


def _make_kernel(*, d, td, k_steps, k_per, tb):
    n_chunks = td // 128
    d_rem = d - (k_steps - 1) * td          # valid columns in the last block
    num_full = k_steps if d_rem == td else k_steps - 1
    tail_full = d_rem // 128                # full chunks in the ragged block
    tail_rem = d_rem % 128                  # lanes in its partial chunk

    def kernel(est_ref, gt_ref, out_ref):
        s = pl.program_id(0)                # reduction split (v7x small batch)
        k = pl.program_id(2)                # local reduction step in the split
        gk = s * k_per + k                  # global reduction step

        @pl.when(k == 0)
        def _init():
            out_ref[...] = jnp.zeros_like(out_ref)

        # Fully-valid reduction blocks: unmasked streaming fold.
        @pl.when(gk < num_full)
        def _full():
            out_ref[...] += _chunk_fold(est_ref, gt_ref, n_chunks, tb)

        # Ragged last block (emitted only when D % td != 0): fold its static
        # number of full chunks, mask the single partial chunk, skip the rest.
        if d_rem != td:
            @pl.when(gk == k_steps - 1)
            def _tail():
                part = _chunk_fold(est_ref, gt_ref, tail_full, tb)
                if tail_rem:
                    off = tail_full * 128
                    diff = (est_ref[:, off:off + 128] -
                            gt_ref[:, off:off + 128]).astype(jnp.float32)
                    lane = lax.broadcasted_iota(jnp.int32, (tb, 128), 1)
                    part = part + jnp.where(lane < tail_rem, diff, 0.0)
                out_ref[...] += part

        @pl.when(k == k_per - 1)
        def _finalize():
            # One cross-lane (XLU) reduce per (split, batch block).  SIGNED
            # row sums (abs is done in the wrapper after combining splits),
            # broadcast over 128 lanes for an unmasked lane-dense store.
            row = jnp.sum(out_ref[...], axis=-1, keepdims=True)   # (tb, 1)
            out_ref[...] = jnp.broadcast_to(row, out_ref.shape)

    return kernel


def ae_batch(estimated_density_map, gt_map, *, max_tile_bytes=4 << 20):
    """Pallas equivalent of AEBatch.forward.

    Args:
      estimated_density_map: (N, C, H, W) array.
      gt_map:                (N, C, H, W) array (same shape).
    Returns:
      (N,) float32 array: |sum over (C,H,W) of (est - gt)| per batch element.
    """
    assert estimated_density_map.shape == gt_map.shape
    n = int(estimated_density_map.shape[0])
    d = 1
    for s in estimated_density_map.shape[1:]:
        d *= int(s)

    est2d = estimated_density_map.reshape(n, d)
    gt2d = gt_map.reshape(n, d)
    itemsize = jnp.dtype(est2d.dtype).itemsize

    # Rows per block match the dtype's sublane packing: 8 f32, 16 bf16, 32 i8.
    base_tb = max(8, 32 // itemsize)

    # Reduction tile: lane-aligned, <= max_tile_bytes per input buffer.
    d_lane = pl.cdiv(d, 128) * 128
    td = max(128, min((max_tile_bytes // (base_tb * itemsize)) // 128 * 128,
                      d_lane))
    k_steps = pl.cdiv(d, td)                # every block's start is < d

    # If D fits in few columns, spend the leftover per-step byte budget on
    # more rows per step (keeps per-step HBM bytes large for small D, big N).
    rows_budget = max(base_tb,
                      (max_tile_bytes // (td * itemsize)) // base_tb * base_tb)
    tb = max(base_tb, min(rows_budget, pl.cdiv(n, base_tb) * base_tb))
    n_blocks = pl.cdiv(n, tb)

    # v7x small-batch path: only one batch block -> split the reduction over a
    # second "parallel" axis so both TensorCores stream HBM.  Per-split sums
    # are signed partials; abs happens in the wrapper after combining.
    n_splits = 2 if (n_blocks == 1 and k_steps >= 2) else 1
    k_per = pl.cdiv(k_steps, n_splits)
    overhang = n_splits * k_per > k_steps   # one clamped step on the last split

    kernel = _make_kernel(d=d, td=td, k_steps=k_steps, k_per=k_per, tb=tb)

    def in_map(s, i, k):
        gk = s * k_per + k
        if overhang:
            # Clamp the (rare) overhang step onto the previous block index so
            # Pallas skips the redundant DMA; the kernel skips its compute.
            gk = jnp.minimum(gk, k_steps - 1)
        return (i, gk)

    out = pl.pallas_call(
        kernel,
        out_shape=jax.ShapeDtypeStruct((n_splits * n_blocks * tb, 128),
                                       jnp.float32),
        grid_spec=pltpu.PrefetchScalarGridSpec(
            num_scalar_prefetch=0,
            grid=(n_splits, n_blocks, k_per),
            in_specs=[
                pl.BlockSpec((tb, td), in_map),
                pl.BlockSpec((tb, td), in_map),
            ],
            # Output block keyed on (split, batch block) only -> resident
            # across the reduction axis, disjoint across the parallel axes.
            out_specs=pl.BlockSpec((tb, 128),
                                   lambda s, i, k: (s * n_blocks + i, 0)),
        ),
        compiler_params=pltpu.CompilerParams(
            dimension_semantics=("parallel", "parallel", "arbitrary"),
            vmem_limit_bytes=32 * 1024 * 1024,
        ),
    )(est2d, gt2d)

    # Signed per-row partials live broadcast in every lane: take lane 0, drop
    # row padding, combine the reduction splits, then take abs.
    partials = out.reshape(n_splits, n_blocks * tb, 128)[:, :n, 0]
    return jnp.abs(jnp.sum(partials, axis=0))


if __name__ == "__main__":
    key = jax.random.PRNGKey(0)
    k_est, k_gt = jax.random.split(key)

    def check(shape, **kw):
        est = jax.random.uniform(k_est, shape, dtype=jnp.float32)
        gt = jax.random.uniform(k_gt, shape, dtype=jnp.float32)
        out = jax.block_until_ready(ae_batch(est, gt, **kw))
        ref = jnp.abs(jnp.sum(est - gt, axis=(1, 2, 3)))
        assert out.shape == (shape[0],)
        assert jnp.allclose(out, ref, atol=1e-4, rtol=1e-4)

    # Main case: (N, C, H, W) = (2, 4, 16, 16); D = 1024 (lane aligned).
    check((2, 4, 16, 16))
    # Ragged D (330) and ragged N (3): exercises the in-kernel tail mask and
    # the unpadded partial batch block (no jnp.pad anywhere).
    check((3, 3, 10, 11))
    # Multi-step reduction with an odd step count + tail mask + the
    # small-batch reduction split (tiny tile budget forces k_steps = 3).
    check((2, 3, 15, 17), max_tile_bytes=8 * 1024)

    print("KERNEL_OK")
</pallas_src>

<mosaic_0001>
module attributes {stable_mosaic.version = 11 : i64} {
  func.func @kernel(%arg0: i32, %arg1: i32, %arg2: i32, %arg3: memref<8x1024xf32, #tpu.memory_space<vmem>>, %arg4: memref<8x1024xf32, #tpu.memory_space<vmem>>, %arg5: memref<8x128xf32, #tpu.memory_space<vmem>>) attributes {dimension_semantics = [#tpu.dimension_semantics<parallel>, #tpu.dimension_semantics<parallel>, #tpu.dimension_semantics<arbitrary>], iteration_bounds = array<i64: 1, 1, 1>, scalar_prefetch = 0 : i64, scratch_operands = 0 : i64, tpu.core_type = #tpu.core_type<tc>, window_params = [{transform_indices = @transform_0, window_bounds = array<i64: 8, 1024>}, {transform_indices = @transform_1, window_bounds = array<i64: 8, 1024>}, {transform_indices = @transform_2, window_bounds = array<i64: 8, 128>}]} {
    %c1_i32 = arith.constant 1 : i32
    %0 = arith.muli %arg0, %c1_i32 : i32
    %1 = arith.addi %0, %arg2 : i32
    %c0_i32 = arith.constant 0 : i32
    %2 = arith.cmpi eq, %arg2, %c0_i32 : i32
    %3 = arith.extui %2 : i1 to i32
    %c0_i32_0 = arith.constant 0 : i32
    %4 = arith.cmpi ne, %3, %c0_i32_0 : i32
    scf.if %4 {
      %cst = arith.constant 0.000000e+00 : f32
      %11 = vector.broadcast %cst : f32 to vector<8x128xf32>
      %c0 = arith.constant 0 : index
      %c0_5 = arith.constant 0 : index
      %12 = vector.load %arg5[%c0, %c0_5] : memref<8x128xf32, #tpu.memory_space<vmem>>, vector<8x128xf32>
      tpu.vector_store %arg5[%c0, %c0_5], %11 {strides = array<i32>} : memref<8x128xf32, #tpu.memory_space<vmem>>, vector<8x128xf32>,
    } else {
    }
    %c1_i32_1 = arith.constant 1 : i32
    %5 = arith.cmpi slt, %1, %c1_i32_1 : i32
    %6 = arith.extui %5 : i1 to i32
    %c0_i32_2 = arith.constant 0 : i32
    %7 = arith.cmpi ne, %6, %c0_i32_2 : i32
    scf.if %7 {
      %c0 = arith.constant 0 : index
      %c0_5 = arith.constant 0 : index
      %11 = vector.load %arg5[%c0, %c0_5] : memref<8x128xf32, #tpu.memory_space<vmem>>, vector<8x128xf32>
      %cst = arith.constant 0.000000e+00 : f32
      %12 = vector.broadcast %cst : f32 to vector<8x128xf32>
      %c0_i32_6 = arith.constant 0 : i32
      %c512_i32 = arith.constant 512 : i32
      %13 = arith.muli %c0_i32_6, %c512_i32 : i32
      %14 = tpu.assume_multiple %13, 128 : i32
      %c0_i32_7 = arith.constant 0 : i32
      %15 = arith.addi %14, %c0_i32_7 : i32
      %c0_8 = arith.constant 0 : index
      %16 = arith.index_cast %15 : i32 to index
      %17 = vector.load %arg3[%c0_8, %16] : memref<8x1024xf32, #tpu.memory_space<vmem>>, vector<8x128xf32>
      %c0_9 = arith.constant 0 : index
      %18 = arith.index_cast %15 : i32 to index
      %19 = vector.load %arg4[%c0_9, %18] : memref<8x1024xf32, #tpu.memory_space<vmem>>, vector<8x128xf32>
      %20 = arith.subf %17, %19 : vector<8x128xf32>
      %21 = arith.addf %12, %20 : vector<8x128xf32>
      %c128_i32 = arith.constant 128 : i32
      %22 = arith.addi %14, %c128_i32 : i32
      %c0_10 = arith.constant 0 : index
      %23 = arith.index_cast %22 : i32 to index
      %24 = vector.load %arg3[%c0_10, %23] : memref<8x1024xf32, #tpu.memory_space<vmem>>, vector<8x128xf32>
      %c0_11 = arith.constant 0 : index
      %25 = arith.index_cast %22 : i32 to index
      %26 = vector.load %arg4[%c0_11, %25] : memref<8x1024xf32, #tpu.memory_space<vmem>>, vector<8x128xf32>
      %27 = arith.subf %24, %26 : vector<8x128xf32>
      %28 = arith.addf %12, %27 : vector<8x128xf32>
      %c256_i32 = arith.constant 256 : i32
      %29 = arith.addi %14, %c256_i32 : i32
      %c0_12 = arith.constant 0 : index
      %30 = arith.index_cast %29 : i32 to index
      %31 = vector.load %arg3[%c0_12, %30] : memref<8x1024xf32, #tpu.memory_space<vmem>>, vector<8x128xf32>
      %c0_13 = arith.constant 0 : index
      %32 = arith.index_cast %29 : i32 to index
      %33 = vector.load %arg4[%c0_13, %32] : memref<8x1024xf32, #tpu.memory_space<vmem>>, vector<8x128xf32>
      %34 = arith.subf %31, %33 : vector<8x128xf32>
      %35 = arith.addf %12, %34 : vector<8x128xf32>
      %c384_i32 = arith.constant 384 : i32
      %36 = arith.addi %14, %c384_i32 : i32
      %c0_14 = arith.constant 0 : index
      %37 = arith.index_cast %36 : i32 to index
      %38 = vector.load %arg3[%c0_14, %37] : memref<8x1024xf32, #tpu.memory_space<vmem>>, vector<8x128xf32>
      %c0_15 = arith.constant 0 : index
      %39 = arith.index_cast %36 : i32 to index
      %40 = vector.load %arg4[%c0_15, %39] : memref<8x1024xf32, #tpu.memory_space<vmem>>, vector<8x128xf32>
      %41 = arith.subf %38, %40 : vector<8x128xf32>
      %42 = arith.addf %12, %41 : vector<8x128xf32>
      %c1_i32_16 = arith.constant 1 : i32
      %c512_i32_17 = arith.constant 512 : i32
      %43 = arith.muli %c1_i32_16, %c512_i32_17 : i32
      %44 = tpu.assume_multiple %43, 128 : i32
      %c0_i32_18 = arith.constant 0 : i32
      %45 = arith.addi %44, %c0_i32_18 : i32
      %c0_19 = arith.constant 0 : index
      %46 = arith.index_cast %45 : i32 to index
      %47 = vector.load %arg3[%c0_19, %46] : memref<8x1024xf32, #tpu.memory_space<vmem>>, vector<8x128xf32>
      %c0_20 = arith.constant 0 : index
      %48 = arith.index_cast %45 : i32 to index
      %49 = vector.load %arg4[%c0_20, %48] : memref<8x1024xf32, #tpu.memory_space<vmem>>, vector<8x128xf32>
      %50 = arith.subf %47, %49 : vector<8x128xf32>
      %51 = arith.addf %21, %50 : vector<8x128xf32>
      %c128_i32_21 = arith.constant 128 : i32
      %52 = arith.addi %44, %c128_i32_21 : i32
      %c0_22 = arith.constant 0 : index
      %53 = arith.index_cast %52 : i32 to index
      %54 = vector.load %arg3[%c0_22, %53] : memref<8x1024xf32, #tpu.memory_space<vmem>>, vector<8x128xf32>
      %c0_23 = arith.constant 0 : index
      %55 = arith.index_cast %52 : i32 to index
      %56 = vector.load %arg4[%c0_23, %55] : memref<8x1024xf32, #tpu.memory_space<vmem>>, vector<8x128xf32>
      %57 = arith.subf %54, %56 : vector<8x128xf32>
      %58 = arith.addf %28, %57 : vector<8x128xf32>
      %c256_i32_24 = arith.constant 256 : i32
      %59 = arith.addi %44, %c256_i32_24 : i32
      %c0_25 = arith.constant 0 : index
      %60 = arith.index_cast %59 : i32 to index
      %61 = vector.load %arg3[%c0_25, %60] : memref<8x1024xf32, #tpu.memory_space<vmem>>, vector<8x128xf32>
      %c0_26 = arith.constant 0 : index
      %62 = arith.index_cast %59 : i32 to index
      %63 = vector.load %arg4[%c0_26, %62] : memref<8x1024xf32, #tpu.memory_space<vmem>>, vector<8x128xf32>
      %64 = arith.subf %61, %63 : vector<8x128xf32>
      %65 = arith.addf %35, %64 : vector<8x128xf32>
      %c384_i32_27 = arith.constant 384 : i32
      %66 = arith.addi %44, %c384_i32_27 : i32
      %c0_28 = arith.constant 0 : index
      %67 = arith.index_cast %66 : i32 to index
      %68 = vector.load %arg3[%c0_28, %67] : memref<8x1024xf32, #tpu.memory_space<vmem>>, vector<8x128xf32>
      %c0_29 = arith.constant 0 : index
      %69 = arith.index_cast %66 : i32 to index
      %70 = vector.load %arg4[%c0_29, %69] : memref<8x1024xf32, #tpu.memory_space<vmem>>, vector<8x128xf32>
      %71 = arith.subf %68, %70 : vector<8x128xf32>
      %72 = arith.addf %42, %71 : vector<8x128xf32>
      %c2_i32 = arith.constant 2 : i32
      %73 = arith.addf %51, %58 : vector<8x128xf32>
      %74 = arith.addf %65, %72 : vector<8x128xf32>
      %75 = arith.addf %73, %74 : vector<8x128xf32>
      %76 = arith.addf %11, %75 : vector<8x128xf32>
      %c0_30 = arith.constant 0 : index
      %c0_31 = arith.constant 0 : index
      %77 = vector.load %arg5[%c0_30, %c0_31] : memref<8x128xf32, #tpu.memory_space<vmem>>, vector<8x128xf32>
      tpu.vector_store %arg5[%c0_30, %c0_31], %76 {strides = array<i32>} : memref<8x128xf32, #tpu.memory_space<vmem>>, vector<8x128xf32>,
    } else {
    }
    %c0_i32_3 = arith.constant 0 : i32
    %8 = arith.cmpi eq, %arg2, %c0_i32_3 : i32
    %9 = arith.extui %8 : i1 to i32
    %c0_i32_4 = arith.constant 0 : i32
    %10 = arith.cmpi ne, %9, %c0_i32_4 : i32
    scf.if %10 {
      %c0 = arith.constant 0 : index
      %c0_5 = arith.constant 0 : index
      %11 = vector.load %arg5[%c0, %c0_5] : memref<8x128xf32, #tpu.memory_space<vmem>>, vector<8x128xf32>
      %cst = arith.constant dense<0.000000e+00> : vector<8xf32>
      %12 = vector.multi_reduction <add>, %11, %cst [1] : vector<8x128xf32> to vector<8xf32>
      %13 = vector.shape_cast %12 : vector<8xf32> to vector<8x1xf32>
      %14 = vector.shape_cast %13 : vector<8x1xf32> to vector<8x1xf32>
      %15 = vector.broadcast %14 : vector<8x1xf32> to vector<8x128xf32>
      %c0_6 = arith.constant 0 : index
      %c0_7 = arith.constant 0 : index
      %16 = vector.load %arg5[%c0_6, %c0_7] : memref<8x128xf32, #tpu.memory_space<vmem>>, vector<8x128xf32>
      tpu.vector_store %arg5[%c0_6, %c0_7], %15 {strides = array<i32>} : memref<8x128xf32, #tpu.memory_space<vmem>>, vector<8x128xf32>,
    } else {
    }
    return
  }
  func.func @transform_0(%arg0: i32, %arg1: i32, %arg2: i32) -> (i32, i32) {
    %c1_i32 = arith.constant 1 : i32
    %0 = arith.muli %arg0, %c1_i32 : i32
    %1 = arith.addi %0, %arg2 : i32
    %c0_i32 = arith.constant 0 : i32
    return %arg1, %1 : i32, i32
  }
  func.func @transform_1(%arg0: i32, %arg1: i32, %arg2: i32) -> (i32, i32) {
    %c1_i32 = arith.constant 1 : i32
    %0 = arith.muli %arg0, %c1_i32 : i32
    %1 = arith.addi %0, %arg2 : i32
    %c0_i32 = arith.constant 0 : i32
    return %arg1, %1 : i32, i32
  }
  func.func @transform_2(%arg0: i32, %arg1: i32, %arg2: i32) -> (i32, i32) {
    %c1_i32 = arith.constant 1 : i32
    %0 = arith.muli %arg0, %c1_i32 : i32
    %1 = arith.addi %0, %arg1 : i32
    %c0_i32 = arith.constant 0 : i32
    %c0_i32_0 = arith.constant 0 : i32
    return %1, %c0_i32 : i32, i32
  }
}

</mosaic_0001>

<llo_original>
// kernel: tpu_custom_call.1
$region0: #{tpu_custom_call.1}
  #allocation0 [shape = 'u32[]', space=smem, size = 0x4, offset = 0x4, fixed_abs, tag = 'smem constant byte address 0x4 - core index']
  #allocation1 [shape = 'u32[144,128]{1,0:T(1,128)}', space=vmem, size = 0x12000, scoped, tag = 'internal scratch']
  %s0 = inlined_call_operand.hbm [shape: f32[2,1024], index: 0, kind: input, shape index: {}]
  %s1 = inlined_call_operand.hbm [shape: f32[2,1024], index: 1, kind: input, shape index: {}]
  %s2 = inlined_call_operand.hbm [shape: f32[8,128], index: 2, kind: output, shape index: {}]
  %s3 = sld [smem:[#allocation0]]
  $region38: #{tpu_custom_call.1} parent=0
    _
  %s5 = ssub.s32 1, %s3
  %s6 = scalar_select 0, %s5, %s3
  $region1: #{tpu_custom_call.1} parent=0
    #allocation2 [shape = 'u8[32768]{0}', space=vmem, size = 0x8000, scoped, tag = 'input window, operand 0, single buffered']
    #allocation3 [shape = 's32[1]{0}', space=sflag, size = 0x4, scoped, tag = 'scoped memory for tpu_custom_call.1']
    #allocation4 [shape = 's32[1]{0}', space=sflag, size = 0x4, scoped, tag = 'scoped memory for tpu_custom_call.1']
    #allocation5 [shape = 'u8[32768]{0}', space=vmem, size = 0x8000, scoped, tag = 'input window, operand 1, single buffered']
    #allocation6 [shape = 's32[1]{0}', space=sflag, size = 0x4, scoped, tag = 'scoped memory for tpu_custom_call.1']
    #allocation7 [shape = 'u8[4096]{0}', space=vmem, size = 0x1000, scoped, tag = 'output window, operand 0, single buffered']
    %7 = vsyncpa [#allocation3], 0
    %8 = vsyncpa [#allocation6], 0
    %9 = vsyncpa [#allocation4], 0
    // Predicated region
    $region2: #{tpu_custom_call.1} parent=1 // pred_check
      _
    $region3: #{tpu_custom_call.1} parent=1 // pred_check_branch
      %11 = sbr.rel (0) target = $region5
    $region4: #{tpu_custom_call.1} parent=1 // pred_region
      %s12 = sadd.s32 0, 0
      %s13 = smul.u32 8, %s12
      %s15 = ssub.s32 1024, 256
      %16 = vsyncadd [#allocation3], %s15
      %s17 = smul.addr %s13, 32
      %s18 = scalar_lea.hbm %s0, %s17
      %s19 = sshll.u32 [#allocation2], 4
      %s20 = int_to_ptr.vmem [resolvable:$true] %s19
      %25 = dma.hbm_to_vmem [thread:$0]  %s18, 256, %s20, [#allocation3], 256, 256, 16
    $region5: #{tpu_custom_call.1} parent=1 // pred_fallthru
      _
    // Predicated region
    $region6: #{tpu_custom_call.1} parent=1 // pred_check
      _
    $region7: #{tpu_custom_call.1} parent=1 // pred_check_branch
      %27 = sbr.rel (0) target = $region9
    $region8: #{tpu_custom_call.1} parent=1 // pred_region
      %s28 = sadd.s32 0, 0
      %s29 = smul.u32 8, %s28
      %s31 = ssub.s32 1024, 256
      %32 = vsyncadd [#allocation6], %s31
      %s33 = smul.addr %s29, 32
      %s34 = scalar_lea.hbm %s1, %s33
      %s35 = sshll.u32 [#allocation5], 4
      %s36 = int_to_ptr.vmem [resolvable:$true] %s35
      %41 = dma.hbm_to_vmem [thread:$0]  %s34, 256, %s36, [#allocation6], 256, 256, 16
    $region9: #{tpu_custom_call.1} parent=1 // pred_fallthru
      _
    // Predicated region
    $region10: #{tpu_custom_call.1} parent=1 // pred_check
      _
    $region11: #{tpu_custom_call.1} parent=1 // pred_check_branch
      %43 = sbr.rel (0) target = $region13
    $region12: #{tpu_custom_call.1} parent=1 // pred_region
      %44 = dma.done [#allocation3], 1024
    $region13: #{tpu_custom_call.1} parent=1 // pred_fallthru
      _
    // Predicated region
    $region14: #{tpu_custom_call.1} parent=1 // pred_check
      _
    $region15: #{tpu_custom_call.1} parent=1 // pred_check_branch
      %46 = sbr.rel (0) target = $region17
    $region16: #{tpu_custom_call.1} parent=1 // pred_region
      %47 = dma.done [#allocation6], 1024
    $region17: #{tpu_custom_call.1} parent=1 // pred_fallthru
      _
    %s48 = sadd.s32 0, 0
    %s49 = smul.u32 8, %s48
    %s50 = sadd.s32 0, 0
    %s51 = smul.u32 8, %s50
    %s52 = sadd.s32 0, 0
    %s53 = sadd.s32 0, 0
    %p54 = scmp.eq.s32.totalorder 0, 0
    // Predicated region
    $region18: #{tpu_custom_call.1} parent=1 // pred_check
      %p55 = pneg %p54
    $region19: #{tpu_custom_call.1} parent=1 // pred_check_branch
      %57 = sbr.rel (%p55) target = $region21
    $region20: #{tpu_custom_call.1} parent=1 // pred_region
      %58 = vst [vmem:[#allocation7] sm:$0xff] 0.0
    $region21: #{tpu_custom_call.1} parent=1 // pred_fallthru
      _
    %p59 = scmp.lt.s32.totalorder %s53, 1
    // Predicated region
    $region22: #{tpu_custom_call.1} parent=1 // pred_check
      %p60 = pneg %p59
    $region23: #{tpu_custom_call.1} parent=1 // pred_check_branch
      %62 = sbr.rel (%p60) target = $region25
    $region24: #{tpu_custom_call.1} parent=1 // pred_region
      %v63 = vld [vmem:[#allocation7] sm:$0xff]
      %v64 = vld [vmem:[#allocation2] sm:$0x3]
      %v65 = vld [vmem:[#allocation2 + $0x10] sm:$0x3]
      %v66 = vld [vmem:[#allocation2 + $0x20] sm:$0x3]
      %v67 = vld [vmem:[#allocation2 + $0x30] sm:$0x3]
      %v68 = vld [vmem:[#allocation5] sm:$0x3]
      %v69 = vld [vmem:[#allocation5 + $0x10] sm:$0x3]
      %v70 = vld [vmem:[#allocation5 + $0x20] sm:$0x3]
      %v71 = vld [vmem:[#allocation5 + $0x30] sm:$0x3]
      %v72 = vsub.f32 %v64, %v68
      %v73 = vsub.f32 %v65, %v69
      %v74 = vsub.f32 %v66, %v70
      %v75 = vsub.f32 %v67, %v71
      %v76 = vadd.f32 %v72, 0.0
      %v77 = vadd.f32 %v73, 0.0
      %v78 = vadd.f32 %v74, 0.0
      %v79 = vadd.f32 %v75, 0.0
      %s80 = sadd.s32 0, 128
      %s81 = sshra.s32 %s80, 7
      %s82 = sand.u32 %s80, 127
      %s83 = smul.addr %s81, 2
      %s84 = scalar_lea.vmem [#allocation2], %s83
      %v85 = vld [vmem:[%s84] sm:$0x3]
      %v86 = vld [vmem:[%s84 + $0x10] sm:$0x3]
      %v87 = vld [vmem:[%s84 + $0x20] sm:$0x3]
      %v88 = vld [vmem:[%s84 + $0x30] sm:$0x3]
      %s89 = smul.addr %s81, 2
      %s90 = scalar_lea.vmem [#allocation5], %s89
      %v91 = vld [vmem:[%s90] sm:$0x3]
      %v92 = vld [vmem:[%s90 + $0x10] sm:$0x3]
      %v93 = vld [vmem:[%s90 + $0x20] sm:$0x3]
      %v94 = vld [vmem:[%s90 + $0x30] sm:$0x3]
      %v95 = vsub.f32 %v85, %v91
      %v96 = vsub.f32 %v86, %v92
      %v97 = vsub.f32 %v87, %v93
      %v98 = vsub.f32 %v88, %v94
      %v99 = vadd.f32 %v95, 0.0
      %v100 = vadd.f32 %v96, 0.0
      %v101 = vadd.f32 %v97, 0.0
      %v102 = vadd.f32 %v98, 0.0
      %s103 = sadd.s32 0, 256
      %s104 = sshra.s32 %s103, 7
      %s105 = sand.u32 %s103, 127
      %s106 = smul.addr %s104, 2
      %s107 = scalar_lea.vmem [#allocation2], %s106
      %v108 = vld [vmem:[%s107] sm:$0x3]
      %v109 = vld [vmem:[%s107 + $0x10] sm:$0x3]
      %v110 = vld [vmem:[%s107 + $0x20] sm:$0x3]
      %v111 = vld [vmem:[%s107 + $0x30] sm:$0x3]
      %s112 = smul.addr %s104, 2
      %s113 = scalar_lea.vmem [#allocation5], %s112
      %v114 = vld [vmem:[%s113] sm:$0x3]
      %v115 = vld [vmem:[%s113 + $0x10] sm:$0x3]
      %v116 = vld [vmem:[%s113 + $0x20] sm:$0x3]
      %v117 = vld [vmem:[%s113 + $0x30] sm:$0x3]
      %v118 = vsub.f32 %v108, %v114
      %v119 = vsub.f32 %v109, %v115
      %v120 = vsub.f32 %v110, %v116
      %v121 = vsub.f32 %v111, %v117
      %v122 = vadd.f32 %v118, 0.0
      %v123 = vadd.f32 %v119, 0.0
      %v124 = vadd.f32 %v120, 0.0
      %v125 = vadd.f32 %v121, 0.0
      %s126 = sadd.s32 0, 384
      %s127 = sshra.s32 %s126, 7
      %s128 = sand.u32 %s126, 127
      %s129 = smul.addr %s127, 2
      %s130 = scalar_lea.vmem [#allocation2], %s129
      %v131 = vld [vmem:[%s130] sm:$0x3]
      %v132 = vld [vmem:[%s130 + $0x10] sm:$0x3]
      %v133 = vld [vmem:[%s130 + $0x20] sm:$0x3]
      %v134 = vld [vmem:[%s130 + $0x30] sm:$0x3]
      %s135 = smul.addr %s127, 2
      %s136 = scalar_lea.vmem [#allocation5], %s135
      %v137 = vld [vmem:[%s136] sm:$0x3]
      %v138 = vld [vmem:[%s136 + $0x10] sm:$0x3]
      %v139 = vld [vmem:[%s136 + $0x20] sm:$0x3]
      %v140 = vld [vmem:[%s136 + $0x30] sm:$0x3]
      %v141 = vsub.f32 %v131, %v137
      %v142 = vsub.f32 %v132, %v138
      %v143 = vsub.f32 %v133, %v139
      %v144 = vsub.f32 %v134, %v140
      %v145 = vadd.f32 %v141, 0.0
      %v146 = vadd.f32 %v142, 0.0
      %v147 = vadd.f32 %v143, 0.0
      %v148 = vadd.f32 %v144, 0.0
      %s149 = scalar_lea.vmem [#allocation2], 8
      %v150 = vld [vmem:[%s149] sm:$0x3]
      %v151 = vld [vmem:[%s149 + $0x10] sm:$0x3]
      %v152 = vld [vmem:[%s149 + $0x20] sm:$0x3]
      %v153 = vld [vmem:[%s149 + $0x30] sm:$0x3]
      %s154 = scalar_lea.vmem [#allocation5], 8
      %v155 = vld [vmem:[%s154] sm:$0x3]
      %v156 = vld [vmem:[%s154 + $0x10] sm:$0x3]
      %v157 = vld [vmem:[%s154 + $0x20] sm:$0x3]
      %v158 = vld [vmem:[%s154 + $0x30] sm:$0x3]
      %v159 = vsub.f32 %v150, %v155
      %v160 = vsub.f32 %v151, %v156
      %v161 = vsub.f32 %v152, %v157
      %v162 = vsub.f32 %v153, %v158
      %v163 = vadd.f32 %v76, %v159
      %v164 = vadd.f32 %v77, %v160
      %v165 = vadd.f32 %v78, %v161
      %v166 = vadd.f32 %v79, %v162
      %s167 = sadd.s32 512, 128
      %s168 = sshra.s32 %s167, 7
      %s169 = sand.u32 %s167, 127
      %s170 = smul.addr %s168, 2
      %s171 = scalar_lea.vmem [#allocation2], %s170
      %v172 = vld [vmem:[%s171] sm:$0x3]
      %v173 = vld [vmem:[%s171 + $0x10] sm:$0x3]
      %v174 = vld [vmem:[%s171 + $0x20] sm:$0x3]
      %v175 = vld [vmem:[%s171 + $0x30] sm:$0x3]
      %s176 = smul.addr %s168, 2
      %s177 = scalar_lea.vmem [#allocation5], %s176
      %v178 = vld [vmem:[%s177] sm:$0x3]
      %v179 = vld [vmem:[%s177 + $0x10] sm:$0x3]
      %v180 = vld [vmem:[%s177 + $0x20] sm:$0x3]
      %v181 = vld [vmem:[%s177 + $0x30] sm:$0x3]
      %v182 = vsub.f32 %v172, %v178
      %v183 = vsub.f32 %v173, %v179
      %v184 = vsub.f32 %v174, %v180
      %v185 = vsub.f32 %v175, %v181
      %v186 = vadd.f32 %v99, %v182
      %v187 = vadd.f32 %v100, %v183
      %v188 = vadd.f32 %v101, %v184
      %v189 = vadd.f32 %v102, %v185
      %s190 = sadd.s32 512, 256
      %s191 = sshra.s32 %s190, 7
      %s192 = sand.u32 %s190, 127
      %s193 = smul.addr %s191, 2
      %s194 = scalar_lea.vmem [#allocation2], %s193
      %v195 = vld [vmem:[%s194] sm:$0x3]
      %v196 = vld [vmem:[%s194 + $0x10] sm:$0x3]
      %v197 = vld [vmem:[%s194 + $0x20] sm:$0x3]
      %v198 = vld [vmem:[%s194 + $0x30] sm:$0x3]
      %s199 = smul.addr %s191, 2
      %s200 = scalar_lea.vmem [#allocation5], %s199
      %v201 = vld [vmem:[%s200] sm:$0x3]
      %v202 = vld [vmem:[%s200 + $0x10] sm:$0x3]
      %v203 = vld [vmem:[%s200 + $0x20] sm:$0x3]
      %v204 = vld [vmem:[%s200 + $0x30] sm:$0x3]
      %v205 = vsub.f32 %v195, %v201
      %v206 = vsub.f32 %v196, %v202
      %v207 = vsub.f32 %v197, %v203
      %v208 = vsub.f32 %v198, %v204
      %v209 = vadd.f32 %v122, %v205
      %v210 = vadd.f32 %v123, %v206
      %v211 = vadd.f32 %v124, %v207
      %v212 = vadd.f32 %v125, %v208
      %s213 = sadd.s32 512, 384
      %s214 = sshra.s32 %s213, 7
      %s215 = sand.u32 %s213, 127
      %s216 = smul.addr %s214, 2
      %s217 = scalar_lea.vmem [#allocation2], %s216
      %v218 = vld [vmem:[%s217] sm:$0x3]
      %v219 = vld [vmem:[%s217 + $0x10] sm:$0x3]
      %v220 = vld [vmem:[%s217 + $0x20] sm:$0x3]
      %v221 = vld [vmem:[%s217 + $0x30] sm:$0x3]
      %s222 = smul.addr %s214, 2
      %s223 = scalar_lea.vmem [#allocation5], %s222
      %v224 = vld [vmem:[%s223] sm:$0x3]
      %v225 = vld [vmem:[%s223 + $0x10] sm:$0x3]
      %v226 = vld [vmem:[%s223 + $0x20] sm:$0x3]
      %v227 = vld [vmem:[%s223 + $0x30] sm:$0x3]
      %v228 = vsub.f32 %v218, %v224
      %v229 = vsub.f32 %v219, %v225
      %v230 = vsub.f32 %v220, %v226
      %v231 = vsub.f32 %v221, %v227
      %v232 = vadd.f32 %v145, %v228
      %v233 = vadd.f32 %v146, %v229
      %v234 = vadd.f32 %v147, %v230
      %v235 = vadd.f32 %v148, %v231
      %v236 = vadd.f32 %v163, %v186
      %v237 = vadd.f32 %v164, %v187
      %v238 = vadd.f32 %v165, %v188
      %v239 = vadd.f32 %v166, %v189
      %v240 = vadd.f32 %v209, %v232
      %v241 = vadd.f32 %v210, %v233
      %v242 = vadd.f32 %v211, %v234
      %v243 = vadd.f32 %v212, %v235
      %v244 = vadd.f32 %v236, %v240
      %v245 = vadd.f32 %v237, %v241
      %v246 = vadd.f32 %v238, %v242
      %v247 = vadd.f32 %v239, %v243
      %v252 = vcombine.low %v244, %v245
      %v253 = vcombine.low %v246, %v247
      %v255 = vunpack.c.l.s4 1983009808
      %v256 = vunpack.c.0.s8 %v255
      %v257 = vlaneseq
      %v258 = vshrl.u32 %v257, 7
      %v259 = vsub.s32 %v256, %v258
      %v260 = vrot.slane %v252, %v259
      %v262 = vunpack.c.l.s4 1983009808
      %v263 = vunpack.c.0.s8 %v262
      %v264 = vlaneseq
      %v265 = vshrl.u32 %v264, 7
      %v266 = vsub.s32 %v263, %v265
      %v267 = vrot.slane %v253, %v266
      %v268 = vcombine.low %v260, %v267
      %v270 = vadd.f32 %v63, %v268
      %271 = vst [vmem:[#allocation7] sm:$0xff] %v270
    $region25: #{tpu_custom_call.1} parent=1 // pred_fallthru
      _
    // Predicated region
    $region26: #{tpu_custom_call.1} parent=1 // pred_check
      %p272 = pneg %p54
    $region27: #{tpu_custom_call.1} parent=1 // pred_check_branch
      %274 = sbr.rel (%p272) target = $region29
    $region28: #{tpu_custom_call.1} parent=1 // pred_region
      %v275 = vld [vmem:[#allocation7] sm:$0xff]
      %276 = vadd.xlane.f32.xlu0 %v275
      %v277 = vpop.xlane.xlu0 %276
      %278 = vst [vmem:[#allocation7] sm:$0xff] %v277
    $region29: #{tpu_custom_call.1} parent=1 // pred_fallthru
      _
    // Predicated region
    $region30: #{tpu_custom_call.1} parent=1 // pred_check
      _
    $region31: #{tpu_custom_call.1} parent=1 // pred_check_branch
      %280 = sbr.rel (0) target = $region33
    $region32: #{tpu_custom_call.1} parent=1 // pred_region
      %s281 = sadd.s32 0, 0
      %s283 = ssub.s32 128, 128
      %284 = vsyncadd [#allocation4], %s283
      %s285 = smul.addr %s281, 128
      %s286 = scalar_lea.hbm %s2, %s285
      %s288 = sshll.u32 [#allocation7], 4
      %s289 = int_to_ptr.vmem [resolvable:$true] %s288
      %291 = dma.vmem_to_hbm [thread:$0]  %s289, 128, %s286, [#allocation4]
    $region33: #{tpu_custom_call.1} parent=1 // pred_fallthru
      _
    // Predicated region
    $region34: #{tpu_custom_call.1} parent=1 // pred_check
      _
    $region35: #{tpu_custom_call.1} parent=1 // pred_check_branch
      %293 = sbr.rel (0) target = $region37
    $region36: #{tpu_custom_call.1} parent=1 // pred_region
      %294 = dma.done [#allocation4], 128
    $region37: #{tpu_custom_call.1} parent=1 // pred_fallthru
      _
    %295 = vsyncpa [#allocation3], 1
    %296 = vsyncpa [#allocation6], 1
    %297 = vsyncpa [#allocation4], 1

</llo_original>
